<compile_context>
chip_gen: v7x
topology: tpu7x:2x2x1
jax: 0.10.0
libtpu: 0.0.40
codegen_flags: <defaults>
</compile_context>

<pallas_src>
import math

import jax
import jax.numpy as jnp
from jax import lax
from jax.experimental import pallas as pl
from jax.experimental.pallas import tpu as pltpu


def _round_up(a: int, b: int) -> int:
    return ((a + b - 1) // b) * b


def _geglu_kernel(x_ref, wv_ref, wg_ref, b_ref, o_ref, acc_h, acc_g):
    # x_ref : (tm, tk)   compute dtype (bf16 by default)
    # wv_ref: (tn, tk)   value-half weight rows (PyTorch layout)
    # wg_ref: (tn, tk)   gate-half weight rows
    # b_ref : (2, tn)    [bias_value; bias_gate]
    # o_ref : (tm, tn)
    # acc_h, acc_g: (tm, tn) f32 scratch accumulators
    k = pl.program_id(2)

    @pl.when(k == 0)
    def _():
        acc_h[...] = jnp.zeros_like(acc_h)
        acc_g[...] = jnp.zeros_like(acc_g)

    x = x_ref[...]
    contract_on_last = (((1,), (1,)), ((), ()))  # x[:, k] * w[:, k] -> (tm, tn)
    acc_h[...] += lax.dot_general(x, wv_ref[...], contract_on_last,
                                  preferred_element_type=jnp.float32)
    acc_g[...] += lax.dot_general(x, wg_ref[...], contract_on_last,
                                  preferred_element_type=jnp.float32)

    @pl.when(k == pl.num_programs(2) - 1)
    def _():
        b = b_ref[...].astype(jnp.float32)
        h = acc_h[...] + b[0:1, :]
        g = acc_g[...] + b[1:2, :]
        # Exact GELU (erf), in f32 (matches torch F.gelu default).
        gelu_g = 0.5 * g * (1.0 + lax.erf(g * (1.0 / math.sqrt(2.0))))
        o_ref[...] = (h * gelu_g).astype(o_ref.dtype)


def geglu_pallas(x, weight, bias, *, tm=256, tn=512, tk=512,
                 compute_dtype=jnp.bfloat16):
    """GEGLU forward.

    x:      (..., dim_in)
    weight: (2*dim_out, dim_in)   -- PyTorch nn.Linear layout (kept as-is)
    bias:   (2*dim_out,)
    returns (..., dim_out) in x.dtype
    """
    dim_in = x.shape[-1]
    dim_out = weight.shape[0] // 2

    lead_shape = x.shape[:-1]
    M = math.prod(lead_shape) if lead_shape else 1
    x2d = x.reshape(M, dim_in).astype(compute_dtype)

    # Split the packed projection into value / gate halves: contiguous row
    # slices of the original (2*dim_out, dim_in) layout -- no transpose.
    wv = weight[:dim_out].astype(compute_dtype)   # (dim_out, dim_in)
    wg = weight[dim_out:].astype(compute_dtype)   # (dim_out, dim_in)
    b2 = jnp.stack([bias[:dim_out], bias[dim_out:]], axis=0)  # (2, dim_out)

    # Clamp tiles to the (8,128)-rounded problem so small shapes don't
    # over-pad, then pad M / dim_out / dim_in up to tile multiples.
    tm_eff = min(tm, _round_up(M, 8))
    tn_eff = min(tn, _round_up(dim_out, 128))
    if dim_in <= tk:
        tk_eff = dim_in                      # full-K block: no padding needed
    else:
        tk_eff = max(128, (tk // 128) * 128)  # 128-aligned K tiles

    Mp = _round_up(M, tm_eff)
    Np = _round_up(dim_out, tn_eff)
    Kp = _round_up(dim_in, tk_eff)

    if Mp != M or Kp != dim_in:
        x2d = jnp.pad(x2d, ((0, Mp - M), (0, Kp - dim_in)))
    if Np != dim_out or Kp != dim_in:
        wv = jnp.pad(wv, ((0, Np - dim_out), (0, Kp - dim_in)))
        wg = jnp.pad(wg, ((0, Np - dim_out), (0, Kp - dim_in)))
    if Np != dim_out:
        b2 = jnp.pad(b2, ((0, 0), (0, Np - dim_out)))

    grid_n = Np // tn_eff
    grid_m = Mp // tm_eff
    grid_k = Kp // tk_eff
    # Grid = (N, M, K): K innermost (reduction), M next (weight tile stays
    # resident across the whole M sweep -> minimal HBM weight traffic).
    grid = (grid_n, grid_m, grid_k)

    out = pl.pallas_call(
        _geglu_kernel,
        out_shape=jax.ShapeDtypeStruct((Mp, Np), x.dtype),
        grid_spec=pltpu.PrefetchScalarGridSpec(
            num_scalar_prefetch=0,
            grid=grid,
            in_specs=[
                pl.BlockSpec((tm_eff, tk_eff), lambda j, i, k: (i, k)),  # x
                pl.BlockSpec((tn_eff, tk_eff), lambda j, i, k: (j, k)),  # Wv
                pl.BlockSpec((tn_eff, tk_eff), lambda j, i, k: (j, k)),  # Wg
                pl.BlockSpec((2, tn_eff), lambda j, i, k: (0, j)),       # biases
            ],
            out_specs=pl.BlockSpec((tm_eff, tn_eff), lambda j, i, k: (i, j)),
            scratch_shapes=[
                pltpu.VMEM((tm_eff, tn_eff), jnp.float32),   # acc_h
                pltpu.VMEM((tm_eff, tn_eff), jnp.float32),   # acc_g
            ],
        ),
        compiler_params=pltpu.CompilerParams(
            dimension_semantics=("parallel", "parallel", "arbitrary")),
    )(x2d, wv, wg, b2)

    out = out[:M, :dim_out]
    return out.reshape(*lead_shape, dim_out)


def _geglu_reference(x, weight, bias, dim_out):
    proj = x @ weight.T + bias
    h, g = proj[..., :dim_out], proj[..., dim_out:]
    return h * (0.5 * g * (1.0 + lax.erf(g / math.sqrt(2.0))))


if __name__ == "__main__":
    key = jax.random.PRNGKey(0)
    keys = jax.random.split(key, 9)

    # ---- Test 1: module-spec shapes, bf16 MXU path ---------------------------
    batch, seq, dim_in, dim_out = 2, 8, 32, 64
    bound = 1.0 / math.sqrt(dim_in)
    weight = jax.random.uniform(keys[0], (dim_out * 2, dim_in), jnp.float32, -bound, bound)
    bias = jax.random.uniform(keys[1], (dim_out * 2,), jnp.float32, -bound, bound)
    x = jax.random.normal(keys[2], (batch, seq, dim_in), jnp.float32)

    out = jax.block_until_ready(geglu_pallas(x, weight, bias))
    ref = _geglu_reference(x, weight, bias, dim_out)
    assert out.shape == (batch, seq, dim_out)
    assert jnp.allclose(out, ref, atol=2e-2, rtol=2e-2), "bf16 path mismatch"

    # ---- Test 2: odd shapes (M/N padding), f32 path, tight tolerance --------
    b2_, s2_, din2, dout2 = 2, 7, 32, 48
    bound2 = 1.0 / math.sqrt(din2)
    weight2 = jax.random.uniform(keys[3], (dout2 * 2, din2), jnp.float32, -bound2, bound2)
    bias2 = jax.random.uniform(keys[4], (dout2 * 2,), jnp.float32, -bound2, bound2)
    x2 = jax.random.normal(keys[5], (b2_, s2_, din2), jnp.float32)

    out2 = jax.block_until_ready(
        geglu_pallas(x2, weight2, bias2, compute_dtype=jnp.float32))
    ref2 = _geglu_reference(x2, weight2, bias2, dout2)
    assert out2.shape == (b2_, s2_, dout2)
    assert jnp.allclose(out2, ref2, atol=1e-4, rtol=1e-4), "f32 path mismatch"

    # ---- Test 3: K-tiled reduction path (dim_in > tk), K padding ------------
    b3_, s3_, din3, dout3 = 2, 8, 160, 64
    bound3 = 1.0 / math.sqrt(din3)
    weight3 = jax.random.uniform(keys[6], (dout3 * 2, din3), jnp.float32, -bound3, bound3)
    bias3 = jax.random.uniform(keys[7], (dout3 * 2,), jnp.float32, -bound3, bound3)
    x3 = jax.random.normal(keys[8], (b3_, s3_, din3), jnp.float32)

    out3 = jax.block_until_ready(
        geglu_pallas(x3, weight3, bias3, tk=128, compute_dtype=jnp.float32))
    ref3 = _geglu_reference(x3, weight3, bias3, dout3)
    assert out3.shape == (b3_, s3_, dout3)
    assert jnp.allclose(out3, ref3, atol=1e-4, rtol=1e-4), "K-tiled path mismatch"

    print("KERNEL_OK")
</pallas_src>

<mosaic_0001>
module attributes {stable_mosaic.version = 11 : i64} {
  func.func @_geglu_kernel(%arg0: i32, %arg1: i32, %arg2: i32, %arg3: memref<16x32xbf16, #tpu.memory_space<vmem>>, %arg4: memref<128x32xbf16, #tpu.memory_space<vmem>>, %arg5: memref<128x32xbf16, #tpu.memory_space<vmem>>, %arg6: memref<2x128xf32, #tpu.memory_space<vmem>>, %arg7: memref<16x128xf32, #tpu.memory_space<vmem>>, %arg8: memref<16x128xf32, #tpu.memory_space<vmem>>, %arg9: memref<16x128xf32, #tpu.memory_space<vmem>>) attributes {dimension_semantics = [#tpu.dimension_semantics<parallel>, #tpu.dimension_semantics<parallel>, #tpu.dimension_semantics<arbitrary>], iteration_bounds = array<i64: 1, 1, 1>, scalar_prefetch = 0 : i64, scratch_operands = 2 : i64, tpu.core_type = #tpu.core_type<tc>, window_params = [{transform_indices = @transform_0, window_bounds = array<i64: 16, 32>}, {transform_indices = @transform_1, window_bounds = array<i64: 128, 32>}, {transform_indices = @transform_2, window_bounds = array<i64: 128, 32>}, {transform_indices = @transform_3, window_bounds = array<i64: 2, 128>}, {transform_indices = @transform_4, window_bounds = array<i64: 16, 128>}]} {
    %c0_i32 = arith.constant 0 : i32
    %0 = arith.cmpi eq, %arg2, %c0_i32 : i32
    %1 = arith.extui %0 : i1 to i32
    %c0_i32_0 = arith.constant 0 : i32
    %2 = arith.cmpi ne, %1, %c0_i32_0 : i32
    scf.if %2 {
      %cst_17 = arith.constant 0.000000e+00 : f32
      %17 = vector.broadcast %cst_17 : f32 to vector<16x128xf32>
      %c0_18 = arith.constant 0 : index
      %c0_19 = arith.constant 0 : index
      %18 = vector.load %arg8[%c0_18, %c0_19] : memref<16x128xf32, #tpu.memory_space<vmem>>, vector<16x128xf32>
      tpu.vector_store %arg8[%c0_18, %c0_19], %17 {strides = array<i32>} : memref<16x128xf32, #tpu.memory_space<vmem>>, vector<16x128xf32>,
      %cst_20 = arith.constant 0.000000e+00 : f32
      %19 = vector.broadcast %cst_20 : f32 to vector<16x128xf32>
      %c0_21 = arith.constant 0 : index
      %c0_22 = arith.constant 0 : index
      %20 = vector.load %arg9[%c0_21, %c0_22] : memref<16x128xf32, #tpu.memory_space<vmem>>, vector<16x128xf32>
      tpu.vector_store %arg9[%c0_21, %c0_22], %19 {strides = array<i32>} : memref<16x128xf32, #tpu.memory_space<vmem>>, vector<16x128xf32>,
    } else {
    }
    %c0 = arith.constant 0 : index
    %c0_1 = arith.constant 0 : index
    %3 = vector.load %arg3[%c0, %c0_1] : memref<16x32xbf16, #tpu.memory_space<vmem>>, vector<16x32xbf16>
    %c0_2 = arith.constant 0 : index
    %c0_3 = arith.constant 0 : index
    %4 = vector.load %arg8[%c0_2, %c0_3] : memref<16x128xf32, #tpu.memory_space<vmem>>, vector<16x128xf32>
    %c0_4 = arith.constant 0 : index
    %c0_5 = arith.constant 0 : index
    %5 = vector.load %arg4[%c0_4, %c0_5] : memref<128x32xbf16, #tpu.memory_space<vmem>>, vector<128x32xbf16>
    %cst = arith.constant dense<0.000000e+00> : vector<16x128xf32>
    %6 = tpu.matmul %3, %5, %cst {dimension_numbers = #tpu.dot_dimension_numbers<[1], [1], [0], [0], [0, 0, 1, 0], [], []>} : vector<16x32xbf16>, vector<128x32xbf16>, vector<16x128xf32> -> vector<16x128xf32>
    %7 = arith.addf %4, %6 : vector<16x128xf32>
    %c0_6 = arith.constant 0 : index
    %c0_7 = arith.constant 0 : index
    %8 = vector.load %arg8[%c0_6, %c0_7] : memref<16x128xf32, #tpu.memory_space<vmem>>, vector<16x128xf32>
    tpu.vector_store %arg8[%c0_6, %c0_7], %7 {strides = array<i32>} : memref<16x128xf32, #tpu.memory_space<vmem>>, vector<16x128xf32>,
    %c0_8 = arith.constant 0 : index
    %c0_9 = arith.constant 0 : index
    %9 = vector.load %arg9[%c0_8, %c0_9] : memref<16x128xf32, #tpu.memory_space<vmem>>, vector<16x128xf32>
    %c0_10 = arith.constant 0 : index
    %c0_11 = arith.constant 0 : index
    %10 = vector.load %arg5[%c0_10, %c0_11] : memref<128x32xbf16, #tpu.memory_space<vmem>>, vector<128x32xbf16>
    %cst_12 = arith.constant dense<0.000000e+00> : vector<16x128xf32>
    %11 = tpu.matmul %3, %10, %cst_12 {dimension_numbers = #tpu.dot_dimension_numbers<[1], [1], [0], [0], [0, 0, 1, 0], [], []>} : vector<16x32xbf16>, vector<128x32xbf16>, vector<16x128xf32> -> vector<16x128xf32>
    %12 = arith.addf %9, %11 : vector<16x128xf32>
    %c0_13 = arith.constant 0 : index
    %c0_14 = arith.constant 0 : index
    %13 = vector.load %arg9[%c0_13, %c0_14] : memref<16x128xf32, #tpu.memory_space<vmem>>, vector<16x128xf32>
    tpu.vector_store %arg9[%c0_13, %c0_14], %12 {strides = array<i32>} : memref<16x128xf32, #tpu.memory_space<vmem>>, vector<16x128xf32>,
    %c0_i32_15 = arith.constant 0 : i32
    %14 = arith.cmpi eq, %arg2, %c0_i32_15 : i32
    %15 = arith.extui %14 : i1 to i32
    %c0_i32_16 = arith.constant 0 : i32
    %16 = arith.cmpi ne, %15, %c0_i32_16 : i32
    scf.if %16 {
      %c0_17 = arith.constant 0 : index
      %c0_18 = arith.constant 0 : index
      %17 = vector.load %arg6[%c0_17, %c0_18] : memref<2x128xf32, #tpu.memory_space<vmem>>, vector<2x128xf32>
      %c0_19 = arith.constant 0 : index
      %c0_20 = arith.constant 0 : index
      %18 = vector.load %arg8[%c0_19, %c0_20] : memref<16x128xf32, #tpu.memory_space<vmem>>, vector<16x128xf32>
      %19 = vector.extract_strided_slice %17 {offsets = [0, 0], sizes = [1, 128], strides = [1, 1]} : vector<2x128xf32> to vector<1x128xf32>
      %20 = vector.broadcast %19 : vector<1x128xf32> to vector<16x128xf32>
      %21 = arith.addf %18, %20 : vector<16x128xf32>
      %c0_21 = arith.constant 0 : index
      %c0_22 = arith.constant 0 : index
      %22 = vector.load %arg9[%c0_21, %c0_22] : memref<16x128xf32, #tpu.memory_space<vmem>>, vector<16x128xf32>
      %23 = vector.extract_strided_slice %17 {offsets = [1, 0], sizes = [1, 128], strides = [1, 1]} : vector<2x128xf32> to vector<1x128xf32>
      %24 = vector.broadcast %23 : vector<1x128xf32> to vector<16x128xf32>
      %25 = arith.addf %22, %24 : vector<16x128xf32>
      %cst_23 = arith.constant 5.000000e-01 : f32
      %26 = vector.broadcast %cst_23 : f32 to vector<16x128xf32>
      %27 = arith.mulf %26, %25 : vector<16x128xf32>
      %cst_24 = arith.constant 0.707106769 : f32
      %28 = vector.broadcast %cst_24 : f32 to vector<16x128xf32>
      %29 = arith.mulf %25, %28 : vector<16x128xf32>
      %30 = math.erf %29 : vector<16x128xf32>
      %cst_25 = arith.constant 1.000000e+00 : f32
      %31 = vector.broadcast %cst_25 : f32 to vector<16x128xf32>
      %32 = arith.addf %31, %30 : vector<16x128xf32>
      %33 = arith.mulf %27, %32 : vector<16x128xf32>
      %34 = arith.mulf %21, %33 : vector<16x128xf32>
      %c0_26 = arith.constant 0 : index
      %c0_27 = arith.constant 0 : index
      %35 = vector.load %arg7[%c0_26, %c0_27] : memref<16x128xf32, #tpu.memory_space<vmem>>, vector<16x128xf32>
      tpu.vector_store %arg7[%c0_26, %c0_27], %34 {strides = array<i32>} : memref<16x128xf32, #tpu.memory_space<vmem>>, vector<16x128xf32>,
    } else {
    }
    return
  }
  func.func @transform_0(%arg0: i32, %arg1: i32, %arg2: i32) -> (i32, i32) {
    %c0_i32 = arith.constant 0 : i32
    return %arg1, %arg2 : i32, i32
  }
  func.func @transform_1(%arg0: i32, %arg1: i32, %arg2: i32) -> (i32, i32) {
    %c0_i32 = arith.constant 0 : i32
    return %arg0, %arg2 : i32, i32
  }
  func.func @transform_2(%arg0: i32, %arg1: i32, %arg2: i32) -> (i32, i32) {
    %c0_i32 = arith.constant 0 : i32
    return %arg0, %arg2 : i32, i32
  }
  func.func @transform_3(%arg0: i32, %arg1: i32, %arg2: i32) -> (i32, i32) {
    %c0_i32 = arith.constant 0 : i32
    %c0_i32_0 = arith.constant 0 : i32
    return %c0_i32, %arg0 : i32, i32
  }
  func.func @transform_4(%arg0: i32, %arg1: i32, %arg2: i32) -> (i32, i32) {
    %c0_i32 = arith.constant 0 : i32
    return %arg1, %arg0 : i32, i32
  }
}

</mosaic_0001>

<llo_original>
// kernel: tpu_custom_call.1
$region0: #{tpu_custom_call.1}
  #allocation0 [shape = 'u32[]', space=smem, size = 0x4, offset = 0x4, fixed_abs, tag = 'smem constant byte address 0x4 - core index']
  #allocation1 [shape = 'u32[144,128]{1,0:T(1,128)}', space=vmem, size = 0x12000, scoped, tag = 'internal scratch']
  #allocation2 [shape = 'f32[16,128]{1,0:T(8,128)}', space=vmem, size = 0x2000, scoped, tag = 'scratch operand']
  #allocation3 [shape = 'f32[16,128]{1,0:T(8,128)}', space=vmem, size = 0x2000, scoped, tag = 'scratch operand']
  %s0 = inlined_call_operand.vmem [shape: bf16[16,32], index: 0, kind: input, shape index: {}]
  %s1 = inlined_call_operand.vmem [shape: bf16[128,32], index: 1, kind: input, shape index: {}]
  %s2 = inlined_call_operand.vmem [shape: bf16[128,32], index: 2, kind: input, shape index: {}]
  %s3 = inlined_call_operand.vmem [shape: f32[2,128], index: 3, kind: input, shape index: {}]
  %s4 = inlined_call_operand.hbm [shape: f32[16,128], index: 4, kind: output, shape index: {}]
  %s5 = sld [smem:[#allocation0]]
  $region34: #{tpu_custom_call.1} parent=0
    _
  %s7 = ssub.s32 1, %s5
  %s8 = scalar_select 0, %s7, %s5
  $region1: #{tpu_custom_call.1} parent=0
    #allocation4 [shape = 'u8[8192]{0}', space=vmem, size = 0x2000, scoped, tag = 'output window, operand 0, single buffered']
    #allocation5 [shape = 's32[1]{0}', space=sflag, size = 0x4, scoped, tag = 'scoped memory for tpu_custom_call.1']
    %9 = vsyncpa [#allocation5], 0
    // Predicated region
    $region2: #{tpu_custom_call.1} parent=1 // pred_check
      _
    $region3: #{tpu_custom_call.1} parent=1 // pred_check_branch
      %11 = sbr.rel (0) target = $region5
    $region4: #{tpu_custom_call.1} parent=1 // pred_region
      _
    $region5: #{tpu_custom_call.1} parent=1 // pred_fallthru
      _
    // Predicated region
    $region6: #{tpu_custom_call.1} parent=1 // pred_check
      _
    $region7: #{tpu_custom_call.1} parent=1 // pred_check_branch
      %13 = sbr.rel (0) target = $region9
    $region8: #{tpu_custom_call.1} parent=1 // pred_region
      _
    $region9: #{tpu_custom_call.1} parent=1 // pred_fallthru
      _
    // Predicated region
    $region10: #{tpu_custom_call.1} parent=1 // pred_check
      _
    $region11: #{tpu_custom_call.1} parent=1 // pred_check_branch
      %15 = sbr.rel (0) target = $region13
    $region12: #{tpu_custom_call.1} parent=1 // pred_region
      _
    $region13: #{tpu_custom_call.1} parent=1 // pred_fallthru
      _
    // Predicated region
    $region14: #{tpu_custom_call.1} parent=1 // pred_check
      _
    $region15: #{tpu_custom_call.1} parent=1 // pred_check_branch
      %17 = sbr.rel (0) target = $region17
    $region16: #{tpu_custom_call.1} parent=1 // pred_region
      _
    $region17: #{tpu_custom_call.1} parent=1 // pred_fallthru
      _
    %p19 = scmp.eq.s32.totalorder 0, 0
    // Predicated region
    $region18: #{tpu_custom_call.1} parent=1 // pred_check
      %p20 = pneg %p19
    $region19: #{tpu_custom_call.1} parent=1 // pred_check_branch
      %22 = sbr.rel (%p20) target = $region21
    $region20: #{tpu_custom_call.1} parent=1 // pred_region
      %23 = vst [vmem:[#allocation2] sm:$0xff] 0.0
      %24 = vst [vmem:[#allocation2 + $0x8] sm:$0xff] 0.0
      %25 = vst [vmem:[#allocation3] sm:$0xff] 0.0
      %26 = vst [vmem:[#allocation3 + $0x8] sm:$0xff] 0.0
    $region21: #{tpu_custom_call.1} parent=1 // pred_fallthru
      _
    %v27 = vld [vmem:[%s0] sm:$0xf]
    %v28 = vld [vmem:[%s0 + $0x4] sm:$0xf]
    %v29 = vld [vmem:[#allocation2] sm:$0xff]
    %v30 = vld [vmem:[#allocation2 + $0x8] sm:$0xff]
    %v31 = vld [vmem:[%s1] sm:$0xf]
    %v32 = vld [vmem:[%s1 + $0x4] sm:$0xf]
    %v33 = vld [vmem:[%s1 + $0x8] sm:$0xf]
    %v34 = vld [vmem:[%s1 + $0xc] sm:$0xf]
    %v35 = vld [vmem:[%s1 + $0x10] sm:$0xf]
    %v36 = vld [vmem:[%s1 + $0x14] sm:$0xf]
    %v37 = vld [vmem:[%s1 + $0x18] sm:$0xf]
    %v38 = vld [vmem:[%s1 + $0x1c] sm:$0xf]
    %v39 = vld [vmem:[%s1 + $0x20] sm:$0xf]
    %v40 = vld [vmem:[%s1 + $0x24] sm:$0xf]
    %v41 = vld [vmem:[%s1 + $0x28] sm:$0xf]
    %v42 = vld [vmem:[%s1 + $0x2c] sm:$0xf]
    %v43 = vld [vmem:[%s1 + $0x30] sm:$0xf]
    %v44 = vld [vmem:[%s1 + $0x34] sm:$0xf]
    %v45 = vld [vmem:[%s1 + $0x38] sm:$0xf]
    %v46 = vld [vmem:[%s1 + $0x3c] sm:$0xf]
    %v49 = vunpack.c.l.b16 %v27
    %v50 = vunpack.c.l.b16 %v28
    %v51 = vpack.c.b16 %v50, %v49
    %v68 = vunpack.c.l.b16 %v31
    %v69 = vunpack.c.l.b16 %v32
    %v70 = vunpack.c.l.b16 %v33
    %v71 = vunpack.c.l.b16 %v34
    %v72 = vunpack.c.l.b16 %v35
    %v73 = vunpack.c.l.b16 %v36
    %v74 = vunpack.c.l.b16 %v37
    %v75 = vunpack.c.l.b16 %v38
    %v76 = vunpack.c.l.b16 %v39
    %v77 = vunpack.c.l.b16 %v40
    %v78 = vunpack.c.l.b16 %v41
    %v79 = vunpack.c.l.b16 %v42
    %v80 = vunpack.c.l.b16 %v43
    %v81 = vunpack.c.l.b16 %v44
    %v82 = vunpack.c.l.b16 %v45
    %v83 = vunpack.c.l.b16 %v46
    %v84 = vpack.c.b16 %v69, %v68
    %v85 = vpack.c.b16 %v71, %v70
    %v86 = vpack.c.b16 %v73, %v72
    %v87 = vpack.c.b16 %v75, %v74
    %v88 = vpack.c.b16 %v77, %v76
    %v89 = vpack.c.b16 %v79, %v78
    %v90 = vpack.c.b16 %v81, %v80
    %v91 = vpack.c.b16 %v83, %v82
    %vm92 = vcmask 261120
    %v94 = vsel %vm92, %v51, 0
    %v97 = vsel %vm92, %v84, 0
    %v100 = vsel %vm92, %v85, 0
    %v103 = vsel %vm92, %v86, 0
    %v106 = vsel %vm92, %v87, 0
    %v109 = vsel %vm92, %v88, 0
    %v112 = vsel %vm92, %v89, 0
    %v115 = vsel %vm92, %v90, 0
    %v118 = vsel %vm92, %v91, 0
    %120 = vmatprep.subr.bf16.mxu0 0
    %121 = vmatpush1.bf16.xpose.msra.mxu0 %v97
    %122 = vmatprep.subr.bf16.mxu0 0
    %123 = vmatpush1.bf16.xpose.msra.mxu0 %v100
    %124 = vmatprep.subr.bf16.mxu0 0
    %125 = vmatpush1.bf16.xpose.msra.mxu0 %v103
    %126 = vmatprep.subr.bf16.mxu0 0
    %127 = vmatpush1.bf16.xpose.msra.mxu0 %v106
    %128 = vmatprep.subr.bf16.mxu0 0
    %129 = vmatpush1.bf16.xpose.msra.mxu0 %v109
    %130 = vmatprep.subr.bf16.mxu0 0
    %131 = vmatpush1.bf16.xpose.msra.mxu0 %v112
    %132 = vmatprep.subr.bf16.mxu0 0
    %133 = vmatpush1.bf16.xpose.msra.mxu0 %v115
    %134 = vmatprep.subr.bf16.mxu0 0
    %135 = vmatpush1.bf16.xpose.msra.mxu0 %v118
    %136 = vmatprep.subr.bf16.mxu0 0
    %137 = vmatpush1.bf16.xpose.msra.mxu0 0
    %138 = vmatprep.subr.bf16.mxu0 0
    %139 = vmatpush1.bf16.xpose.msra.mxu0 0
    %140 = vmatprep.subr.bf16.mxu0 0
    %141 = vmatpush1.bf16.xpose.msra.mxu0 0
    %142 = vmatprep.subr.bf16.mxu0 0
    %143 = vmatpush1.bf16.xpose.msra.mxu0 0
    %144 = vmatprep.subr.bf16.mxu0 0
    %145 = vmatpush1.bf16.xpose.msra.mxu0 0
    %146 = vmatprep.subr.bf16.mxu0 0
    %147 = vmatpush1.bf16.xpose.msra.mxu0 0
    %148 = vmatprep.subr.bf16.mxu0 0
    %149 = vmatpush1.bf16.xpose.msra.mxu0 0
    %150 = vmatprep.subr.bf16.mxu0 0
    %151 = vmatpush1.bf16.xpose.msra.mxu0 0
    %152 = vmatprep.mubr.bf16.mxu0 0
    %153 = vmatmul.mubr.bf16.gmra.mrb[0].mxu0 %v94
    %v154 = vpop.f32.mrb[0].mxu0
    %v155 = vadd.f32 0.0, %v154
    %v156 = vpop.f32.mrb[0].mxu0
    %v157 = vpop.f32.mrb[0].mxu0
    %v158 = vadd.f32 0.0, %v157
    %v159 = vpop.f32.mrb[0].mxu0
    %160 = vdwg.mxu0
    %v161 = vadd.f32 %v29, %v155
    %v162 = vadd.f32 %v30, %v158
    %163 = vst [vmem:[#allocation2] sm:$0xff] %v161
    %164 = vst [vmem:[#allocation2 + $0x8] sm:$0xff] %v162
    %v165 = vld [vmem:[#allocation3] sm:$0xff]
    %v166 = vld [vmem:[#allocation3 + $0x8] sm:$0xff]
    %v167 = vld [vmem:[%s2] sm:$0xf]
    %v168 = vld [vmem:[%s2 + $0x4] sm:$0xf]
    %v169 = vld [vmem:[%s2 + $0x8] sm:$0xf]
    %v170 = vld [vmem:[%s2 + $0xc] sm:$0xf]
    %v171 = vld [vmem:[%s2 + $0x10] sm:$0xf]
    %v172 = vld [vmem:[%s2 + $0x14] sm:$0xf]
    %v173 = vld [vmem:[%s2 + $0x18] sm:$0xf]
    %v174 = vld [vmem:[%s2 + $0x1c] sm:$0xf]
    %v175 = vld [vmem:[%s2 + $0x20] sm:$0xf]
    %v176 = vld [vmem:[%s2 + $0x24] sm:$0xf]
    %v177 = vld [vmem:[%s2 + $0x28] sm:$0xf]
    %v178 = vld [vmem:[%s2 + $0x2c] sm:$0xf]
    %v179 = vld [vmem:[%s2 + $0x30] sm:$0xf]
    %v180 = vld [vmem:[%s2 + $0x34] sm:$0xf]
    %v181 = vld [vmem:[%s2 + $0x38] sm:$0xf]
    %v182 = vld [vmem:[%s2 + $0x3c] sm:$0xf]
    %v199 = vunpack.c.l.b16 %v167
    %v200 = vunpack.c.l.b16 %v168
    %v201 = vunpack.c.l.b16 %v169
    %v202 = vunpack.c.l.b16 %v170
    %v203 = vunpack.c.l.b16 %v171
    %v204 = vunpack.c.l.b16 %v172
    %v205 = vunpack.c.l.b16 %v173
    %v206 = vunpack.c.l.b16 %v174
    %v207 = vunpack.c.l.b16 %v175
    %v208 = vunpack.c.l.b16 %v176
    %v209 = vunpack.c.l.b16 %v177
    %v210 = vunpack.c.l.b16 %v178
    %v211 = vunpack.c.l.b16 %v179
    %v212 = vunpack.c.l.b16 %v180
    %v213 = vunpack.c.l.b16 %v181
    %v214 = vunpack.c.l.b16 %v182
    %v215 = vpack.c.b16 %v200, %v199
    %v216 = vpack.c.b16 %v202, %v201
    %v217 = vpack.c.b16 %v204, %v203
    %v218 = vpack.c.b16 %v206, %v205
    %v219 = vpack.c.b16 %v208, %v207
    %v220 = vpack.c.b16 %v210, %v209
    %v221 = vpack.c.b16 %v212, %v211
    %v222 = vpack.c.b16 %v214, %v213
    %v224 = vsel %vm92, %v215, 0
    %v227 = vsel %vm92, %v216, 0
    %v230 = vsel %vm92, %v217, 0
    %v233 = vsel %vm92, %v218, 0
    %v236 = vsel %vm92, %v219, 0
    %v239 = vsel %vm92, %v220, 0
    %v242 = vsel %vm92, %v221, 0
    %v245 = vsel %vm92, %v222, 0
    %247 = vmatprep.subr.bf16.mxu0 0
    %248 = vmatpush1.bf16.xpose.msra.mxu0 %v224
    %249 = vmatprep.subr.bf16.mxu0 0
    %250 = vmatpush1.bf16.xpose.msra.mxu0 %v227
    %251 = vmatprep.subr.bf16.mxu0 0
    %252 = vmatpush1.bf16.xpose.msra.mxu0 %v230
    %253 = vmatprep.subr.bf16.mxu0 0
    %254 = vmatpush1.bf16.xpose.msra.mxu0 %v233
    %255 = vmatprep.subr.bf16.mxu0 0
    %256 = vmatpush1.bf16.xpose.msra.mxu0 %v236
    %257 = vmatprep.subr.bf16.mxu0 0
    %258 = vmatpush1.bf16.xpose.msra.mxu0 %v239
    %259 = vmatprep.subr.bf16.mxu0 0
    %260 = vmatpush1.bf16.xpose.msra.mxu0 %v242
    %261 = vmatprep.subr.bf16.mxu0 0
    %262 = vmatpush1.bf16.xpose.msra.mxu0 %v245
    %263 = vmatprep.subr.bf16.mxu0 0
    %264 = vmatpush1.bf16.xpose.msra.mxu0 0
    %265 = vmatprep.subr.bf16.mxu0 0
    %266 = vmatpush1.bf16.xpose.msra.mxu0 0
    %267 = vmatprep.subr.bf16.mxu0 0
    %268 = vmatpush1.bf16.xpose.msra.mxu0 0
    %269 = vmatprep.subr.bf16.mxu0 0
    %270 = vmatpush1.bf16.xpose.msra.mxu0 0
    %271 = vmatprep.subr.bf16.mxu0 0
    %272 = vmatpush1.bf16.xpose.msra.mxu0 0
    %273 = vmatprep.subr.bf16.mxu0 0
    %274 = vmatpush1.bf16.xpose.msra.mxu0 0
    %275 = vmatprep.subr.bf16.mxu0 0
    %276 = vmatpush1.bf16.xpose.msra.mxu0 0
    %277 = vmatprep.subr.bf16.mxu0 0
    %278 = vmatpush1.bf16.xpose.msra.mxu0 0
    %279 = vmatprep.mubr.bf16.mxu0 0
    %280 = vmatmul.mubr.bf16.gmra.mrb[0].mxu0 %v94
    %v281 = vpop.f32.mrb[0].mxu0
    %v282 = vadd.f32 0.0, %v281
    %v283 = vpop.f32.mrb[0].mxu0
    %v284 = vpop.f32.mrb[0].mxu0
    %v285 = vadd.f32 0.0, %v284
    %v286 = vpop.f32.mrb[0].mxu0
    %287 = vdwg.mxu0
    %v288 = vadd.f32 %v165, %v282
    %v289 = vadd.f32 %v166, %v285
    %290 = vst [vmem:[#allocation3] sm:$0xff] %v288
    %291 = vst [vmem:[#allocation3 + $0x8] sm:$0xff] %v289
    // Predicated region
    $region22: #{tpu_custom_call.1} parent=1 // pred_check
      %p292 = pneg %p19
    $region23: #{tpu_custom_call.1} parent=1 // pred_check_branch
      %294 = sbr.rel (%p292) target = $region25
    $region24: #{tpu_custom_call.1} parent=1 // pred_region
      %v295 = vld [vmem:[%s3] sm:$0x3]
      %v296 = vld [vmem:[#allocation2] sm:$0xff]
      %v297 = vld [vmem:[#allocation2 + $0x8] sm:$0xff]
      %v298 = vlaneseq
      %v299 = vshrl.u32 %v298, 7
      %v300 = vsub.s32 0, %v299
      %v301 = vrot.slane %v295, %v300
      %v302 = vadd.f32 %v296, %v301
      %v303 = vadd.f32 %v297, %v301
      %v304 = vld [vmem:[#allocation3] sm:$0xff]
      %v305 = vld [vmem:[#allocation3 + $0x8] sm:$0xff]
      %v306 = vlaneseq
      %v307 = vshrl.u32 %v306, 7
      %v308 = vsub.s32 1, %v307
      %v309 = vrot.slane %v295, %v308
      %v310 = vadd.f32 %v304, %v309
      %v311 = vadd.f32 %v305, %v309
      %v312 = vmul.f32 %v310, 0.5
      %v313 = vmul.f32 %v311, 0.5
      %v314 = vmul.f32 %v310, 0.70710677
      %v315 = vmul.f32 %v311, 0.70710677
      %v316 = verf.f32.pop %v314
      %v317 = verf.f32.pop %v315
      %v318 = vadd.f32 %v316, 1.0
      %v319 = vadd.f32 %v317, 1.0
      %v320 = vmul.f32 %v312, %v318
      %v321 = vmul.f32 %v313, %v319
      %v322 = vmul.f32 %v302, %v320
      %v323 = vmul.f32 %v303, %v321
      %324 = vst [vmem:[#allocation4] sm:$0xff] %v322
      %325 = vst [vmem:[#allocation4 + $0x8] sm:$0xff] %v323
    $region25: #{tpu_custom_call.1} parent=1 // pred_fallthru
      _
    // Predicated region
    $region26: #{tpu_custom_call.1} parent=1 // pred_check
      _
    $region27: #{tpu_custom_call.1} parent=1 // pred_check_branch
      %327 = sbr.rel (0) target = $region29
    $region28: #{tpu_custom_call.1} parent=1 // pred_region
      %s329 = ssub.s32 256, 256
      %330 = vsyncadd [#allocation5], %s329
      %s331 = sshll.u32 [#allocation4], 4
      %s332 = int_to_ptr.vmem [resolvable:$true] %s331
      %337 = dma.vmem_to_hbm [thread:$0]  %s332, 256, %s4, [#allocation5], 128, 128, 8
    $region29: #{tpu_custom_call.1} parent=1 // pred_fallthru
      _
    // Predicated region
    $region30: #{tpu_custom_call.1} parent=1 // pred_check
      _
    $region31: #{tpu_custom_call.1} parent=1 // pred_check_branch
      %339 = sbr.rel (0) target = $region33
    $region32: #{tpu_custom_call.1} parent=1 // pred_region
      %340 = dma.done [#allocation5], 256
    $region33: #{tpu_custom_call.1} parent=1 // pred_fallthru
      _
    %341 = vsyncpa [#allocation5], 1

</llo_original>
